<compile_context>
chip_gen: v5e
topology: v5e:2x2
jax: 0.10.0
libtpu: 0.0.40
codegen_flags: <defaults>
</compile_context>

<pallas_src>
import jax
import jax.numpy as jnp
from jax import lax
from jax.experimental import pallas as pl
from jax.experimental.pallas import tpu as pltpu

EPS = 1e-5


# --------------------------------- kernel ---------------------------------
def _resconv_kernel(x_ref, a1_ref, a2_ref, g1_ref, be1_ref, g2_ref, be2_ref,
                    p_ref, pt_ref, o_ref):
    # x_ref : (N, H, W*C) f32        lane-dense activation slab
    # a*_ref: (3*W*C, W*C) bf16      folded conv weights (H-tap major)
    # g/be  : (1, C) f32             BN affine params
    # p_ref : (W*C, C) f32           per-channel reduction selector
    # pt_ref: (C, W*C) f32           per-channel broadcast selector
    N, H, WC = x_ref.shape
    C = g1_ref.shape[-1]
    R = N * H * (WC // C)            # BN reduction count = N*H*W
    inv_r = 1.0 / R

    x3 = x_ref[...]                  # (N, H, WC) f32
    x2 = x3.reshape(N * H, WC)       # residual path (leading-dim merge: free)
    p = p_ref[...]
    pt = pt_ref[...]

    def circ_conv(h3, a_ref):
        # h3: (N, H, WC).  H circular taps via 2 rolls; W taps are folded into
        # the block-banded weight -> one MXU matmul with K = 3*WC.
        hb = h3.astype(jnp.bfloat16)
        patches = jnp.concatenate(
            [jnp.roll(hb, 1, axis=1),      # di = -1
             hb,                           # di =  0
             jnp.roll(hb, -1, axis=1)],    # di = +1
            axis=-1)                       # (N, H, 3*WC)
        patches = patches.reshape(N * H, 3 * WC)
        return jnp.dot(patches, a_ref[...],
                       preferred_element_type=jnp.float32)     # (N*H, WC) f32

    def bn_fold(y2, g_ref, be_ref):
        # Single-pass training-mode batch statistics, folded to scale+shift.
        s1 = jnp.dot(jnp.sum(y2, axis=0, keepdims=True), p,
                     preferred_element_type=jnp.float32)        # (1, C) sum
        s2 = jnp.dot(jnp.sum(y2 * y2, axis=0, keepdims=True), p,
                     preferred_element_type=jnp.float32)        # (1, C) sumsq
        mean = s1 * inv_r
        var = s2 * inv_r - mean * mean                          # biased var
        scale = g_ref[...] * lax.rsqrt(var + EPS)               # (1, C)
        shift = be_ref[...] - mean * scale                      # (1, C)
        scale_l = jnp.dot(scale, pt, preferred_element_type=jnp.float32)  # (1, WC)
        shift_l = jnp.dot(shift, pt, preferred_element_type=jnp.float32)  # (1, WC)
        return y2 * scale_l + shift_l

    # conv1 -> bn1 -> relu
    h = jnp.maximum(bn_fold(circ_conv(x3, a1_ref), g1_ref, be1_ref), 0.0)
    # conv2 -> bn2
    h = bn_fold(circ_conv(h.reshape(N, H, WC), a2_ref), g2_ref, be2_ref)
    # residual add + final relu (fully lane-dense store)
    o_ref[...] = jnp.maximum(x2 + h, 0.0).reshape(N, H, WC)


# ------------------------------ weight folding ------------------------------
def _fold_conv_weight(w, W):
    """w: (3, 3, Cin, Cout) with w[di+1, dj+1, ci, co].
    Returns A: (3, W*C, W*C) with A[a, ju*C+ci, jv*C+co] = w[a, dj+1, ci, co]
    where dj in {-1,0,1} satisfies (ju - jv) mod W == dj mod W, else 0."""
    C = w.shape[-1]
    ju = jnp.arange(W)[:, None]
    jv = jnp.arange(W)[None, :]
    d = (ju - jv) % W
    sels = [(W - 1, 0),   # dj = -1
            (0, 1),       # dj =  0
            (1, 2)]       # dj = +1
    A = sum(jnp.einsum('uv,aio->auivo', (d == dv).astype(w.dtype), w[:, b])
            for dv, b in sels)
    return A.reshape(3, W * C, W * C)


# --------------------------------- wrapper ---------------------------------
def resconv_block(x, params):
    """x: (N, H, W, C) f32 NHWC (PyTorch NCHW transposed).  Returns (N, H, W, C)."""
    N, H, W, C = x.shape
    assert H >= 3 and W >= 3, "circular 3x3 conv assumes H, W >= 3"
    WC = W * C

    x_l = x.reshape(N, H, WC)                                   # lane-dense slab
    a1 = _fold_conv_weight(params["w1"], W).reshape(3 * WC, WC).astype(jnp.bfloat16)
    a2 = _fold_conv_weight(params["w2"], W).reshape(3 * WC, WC).astype(jnp.bfloat16)
    eye = jnp.eye(C, dtype=jnp.float32)
    p = jnp.tile(eye, (W, 1))                                   # (WC, C)
    pt = jnp.tile(eye, (1, W))                                  # (C, WC)

    conv_flops = 2 * 2 * (N * H) * (3 * WC) * WC                # two convs: 2*M*K*N
    bn_flops = 2 * 6 * (N * H) * WC
    bytes_accessed = (2 * N * H * WC * 4                        # x in + out
                      + 2 * (3 * WC) * WC * 2                   # bf16 folded weights
                      + (WC * C + C * WC + 4 * C) * 4)          # selectors + BN params
    cost = pl.CostEstimate(flops=conv_flops + bn_flops,
                           transcendentals=2 * C,
                           bytes_accessed=bytes_accessed)

    vmem = pl.BlockSpec(memory_space=pltpu.MemorySpace.VMEM)
    out = pl.pallas_call(
        _resconv_kernel,
        out_shape=jax.ShapeDtypeStruct((N, H, WC), jnp.float32),
        in_specs=[vmem] * 9,
        out_specs=vmem,
        compiler_params=pltpu.CompilerParams(vmem_limit_bytes=32 * 1024 * 1024),
        cost_estimate=cost,
    )(x_l, a1, a2,
      params["g1"], params["be1"], params["g2"], params["be2"], p, pt)
    return out.reshape(N, H, W, C)


# ------------------- plain-JAX f32 reference (PyTorch math) -------------------
def _ref_circ_conv(x4, w, b):
    acc = jnp.zeros(x4.shape[:3] + (w.shape[-1],), jnp.float32)
    for a, di in enumerate((-1, 0, 1)):
        for bt, dj in enumerate((-1, 0, 1)):
            sh = jnp.roll(jnp.roll(x4, -di, axis=1), -dj, axis=2)
            acc = acc + jnp.einsum('nhwc,co->nhwo', sh, w[a, bt])
    return acc + b.reshape(1, 1, 1, -1)


def _ref_bn(y4, g, be):
    mean = jnp.mean(y4, axis=(0, 1, 2), keepdims=True)
    var = jnp.mean((y4 - mean) ** 2, axis=(0, 1, 2), keepdims=True)
    return ((y4 - mean) * lax.rsqrt(var + EPS) * g.reshape(1, 1, 1, -1)
            + be.reshape(1, 1, 1, -1))


def ref_forward(x, prm):
    h = jnp.maximum(_ref_bn(_ref_circ_conv(x, prm["w1"], prm["b1"]),
                            prm["g1"], prm["be1"]), 0.0)
    h = _ref_bn(_ref_circ_conv(h, prm["w2"], prm["b2"]), prm["g2"], prm["be2"])
    return jnp.maximum(x + h, 0.0)


# --------------------------------- parameters ---------------------------------
def init_params(key, width):
    ks = jax.random.split(key, 10)
    fan_in = width * 9
    scale = 1.0 / jnp.sqrt(fan_in)
    # conv weights stored as (3, 3, Cin, Cout): w[di+1, dj+1, ci, co]
    w1 = jax.random.uniform(ks[0], (3, 3, width, width), jnp.float32, -scale, scale)
    b1 = jax.random.uniform(ks[1], (width,), jnp.float32, -scale, scale)
    w2 = jax.random.uniform(ks[2], (3, 3, width, width), jnp.float32, -scale, scale)
    b2 = jax.random.uniform(ks[3], (width,), jnp.float32, -scale, scale)
    g1 = 1.0 + 0.1 * jax.random.normal(ks[4], (1, width), jnp.float32)
    be1 = 0.1 * jax.random.normal(ks[5], (1, width), jnp.float32)
    g2 = 1.0 + 0.1 * jax.random.normal(ks[6], (1, width), jnp.float32)
    be2 = 0.1 * jax.random.normal(ks[7], (1, width), jnp.float32)
    return dict(w1=w1, b1=b1, w2=w2, b2=b2, g1=g1, be1=be1, g2=g2, be2=be2)


if __name__ == "__main__":
    # NHWC; equivalent PyTorch NCHW input shape: (2, 8, 16, 16), width = 8
    N, H, W, C = 2, 16, 16, 8
    key = jax.random.PRNGKey(0)
    kx, kp = jax.random.split(key)
    x = jax.random.normal(kx, (N, H, W, C), jnp.float32)
    params = init_params(kp, C)

    out = jax.block_until_ready(resconv_block(x, params))
    ref = jax.block_until_ready(ref_forward(x, params))

    assert out.shape == (N, H, W, C)
    # Reference is full f32 and includes the conv biases the kernel drops
    # (they cancel under training-mode BN); tolerance covers bf16 MXU operands.
    assert jnp.allclose(out, ref, atol=3e-2, rtol=3e-2), \
        "Pallas kernel mismatch vs JAX reference"

    print("KERNEL_OK")
</pallas_src>

<mosaic_0001>
module attributes {stable_mosaic.version = 11 : i64} {
  func.func @_resconv_kernel(%arg0: memref<2x16x128xf32, #tpu.memory_space<vmem>>, %arg1: memref<384x128xbf16, #tpu.memory_space<vmem>>, %arg2: memref<384x128xbf16, #tpu.memory_space<vmem>>, %arg3: memref<1x8xf32, #tpu.memory_space<vmem>>, %arg4: memref<1x8xf32, #tpu.memory_space<vmem>>, %arg5: memref<1x8xf32, #tpu.memory_space<vmem>>, %arg6: memref<1x8xf32, #tpu.memory_space<vmem>>, %arg7: memref<128x8xf32, #tpu.memory_space<vmem>>, %arg8: memref<8x128xf32, #tpu.memory_space<vmem>>, %arg9: memref<2x16x128xf32, #tpu.memory_space<vmem>>) attributes {dimension_semantics = [], scalar_prefetch = 0 : i64, scratch_operands = 0 : i64, tpu.core_type = #tpu.core_type<tc>} {
    %c0 = arith.constant 0 : index
    %c0_0 = arith.constant 0 : index
    %c0_1 = arith.constant 0 : index
    %0 = vector.load %arg0[%c0, %c0_0, %c0_1] : memref<2x16x128xf32, #tpu.memory_space<vmem>>, vector<2x16x128xf32>
    %1 = vector.shape_cast %0 : vector<2x16x128xf32> to vector<32x128xf32>
    %c0_2 = arith.constant 0 : index
    %c0_3 = arith.constant 0 : index
    %2 = vector.load %arg7[%c0_2, %c0_3] : memref<128x8xf32, #tpu.memory_space<vmem>>, vector<128x8xf32>
    %c0_4 = arith.constant 0 : index
    %c0_5 = arith.constant 0 : index
    %3 = vector.load %arg8[%c0_4, %c0_5] : memref<8x128xf32, #tpu.memory_space<vmem>>, vector<8x128xf32>
    %4 = arith.truncf %0 : vector<2x16x128xf32> to vector<2x16x128xbf16>
    %5 = vector.extract_strided_slice %4 {offsets = [0, 15, 0], sizes = [2, 1, 128], strides = [1, 1, 1]} : vector<2x16x128xbf16> to vector<2x1x128xbf16>
    %6 = vector.extract_strided_slice %4 {offsets = [0, 0, 0], sizes = [2, 15, 128], strides = [1, 1, 1]} : vector<2x16x128xbf16> to vector<2x15x128xbf16>
    %7 = tpu.concatenate %5, %6 in 1 : vector<2x1x128xbf16>, vector<2x15x128xbf16> -> vector<2x16x128xbf16>
    %8 = vector.extract_strided_slice %4 {offsets = [0, 1, 0], sizes = [2, 15, 128], strides = [1, 1, 1]} : vector<2x16x128xbf16> to vector<2x15x128xbf16>
    %9 = vector.extract_strided_slice %4 {offsets = [0, 0, 0], sizes = [2, 1, 128], strides = [1, 1, 1]} : vector<2x16x128xbf16> to vector<2x1x128xbf16>
    %10 = tpu.concatenate %8, %9 in 1 : vector<2x15x128xbf16>, vector<2x1x128xbf16> -> vector<2x16x128xbf16>
    %11 = tpu.concatenate %7, %4, %10 in 2 : vector<2x16x128xbf16>, vector<2x16x128xbf16>, vector<2x16x128xbf16> -> vector<2x16x384xbf16>
    %12 = vector.shape_cast %11 : vector<2x16x384xbf16> to vector<32x384xbf16>
    %c0_6 = arith.constant 0 : index
    %c0_7 = arith.constant 0 : index
    %13 = vector.load %arg1[%c0_6, %c0_7] : memref<384x128xbf16, #tpu.memory_space<vmem>>, vector<384x128xbf16>
    %cst = arith.constant dense<0.000000e+00> : vector<32x128xf32>
    %14 = tpu.matmul %12, %13, %cst {dimension_numbers = #tpu.dot_dimension_numbers<[1], [0], [0], [1], [0, 0, 1, 1], [], []>} : vector<32x384xbf16>, vector<384x128xbf16>, vector<32x128xf32> -> vector<32x128xf32>
    %cst_8 = arith.constant dense<0.000000e+00> : vector<128xf32>
    %15 = vector.multi_reduction <add>, %14, %cst_8 [0] : vector<32x128xf32> to vector<128xf32>
    %16 = vector.shape_cast %15 : vector<128xf32> to vector<1x128xf32>
    %cst_9 = arith.constant dense<0.000000e+00> : vector<1x8xf32>
    %17 = tpu.matmul %16, %2, %cst_9 {dimension_numbers = #tpu.dot_dimension_numbers<[1], [0], [0], [1], [0, 0, 1, 1], [], []>} : vector<1x128xf32>, vector<128x8xf32>, vector<1x8xf32> -> vector<1x8xf32>
    %18 = arith.mulf %14, %14 : vector<32x128xf32>
    %cst_10 = arith.constant dense<0.000000e+00> : vector<128xf32>
    %19 = vector.multi_reduction <add>, %18, %cst_10 [0] : vector<32x128xf32> to vector<128xf32>
    %20 = vector.shape_cast %19 : vector<128xf32> to vector<1x128xf32>
    %cst_11 = arith.constant dense<0.000000e+00> : vector<1x8xf32>
    %21 = tpu.matmul %20, %2, %cst_11 {dimension_numbers = #tpu.dot_dimension_numbers<[1], [0], [0], [1], [0, 0, 1, 1], [], []>} : vector<1x128xf32>, vector<128x8xf32>, vector<1x8xf32> -> vector<1x8xf32>
    %cst_12 = arith.constant 0.001953125 : f32
    %22 = vector.broadcast %cst_12 : f32 to vector<1x8xf32>
    %23 = arith.mulf %17, %22 : vector<1x8xf32>
    %cst_13 = arith.constant 0.001953125 : f32
    %24 = vector.broadcast %cst_13 : f32 to vector<1x8xf32>
    %25 = arith.mulf %21, %24 : vector<1x8xf32>
    %26 = arith.mulf %23, %23 : vector<1x8xf32>
    %27 = arith.subf %25, %26 : vector<1x8xf32>
    %c0_14 = arith.constant 0 : index
    %c0_15 = arith.constant 0 : index
    %28 = vector.load %arg3[%c0_14, %c0_15] : memref<1x8xf32, #tpu.memory_space<vmem>>, vector<1x8xf32>
    %cst_16 = arith.constant 9.99999974E-6 : f32
    %29 = vector.broadcast %cst_16 : f32 to vector<1x8xf32>
    %30 = arith.addf %27, %29 : vector<1x8xf32>
    %31 = math.rsqrt %30 : vector<1x8xf32>
    %32 = arith.mulf %28, %31 : vector<1x8xf32>
    %c0_17 = arith.constant 0 : index
    %c0_18 = arith.constant 0 : index
    %33 = vector.load %arg4[%c0_17, %c0_18] : memref<1x8xf32, #tpu.memory_space<vmem>>, vector<1x8xf32>
    %34 = arith.mulf %23, %32 : vector<1x8xf32>
    %35 = arith.subf %33, %34 : vector<1x8xf32>
    %cst_19 = arith.constant dense<0.000000e+00> : vector<1x128xf32>
    %36 = tpu.matmul %32, %3, %cst_19 {dimension_numbers = #tpu.dot_dimension_numbers<[1], [0], [0], [1], [0, 0, 1, 1], [], []>} : vector<1x8xf32>, vector<8x128xf32>, vector<1x128xf32> -> vector<1x128xf32>
    %cst_20 = arith.constant dense<0.000000e+00> : vector<1x128xf32>
    %37 = tpu.matmul %35, %3, %cst_20 {dimension_numbers = #tpu.dot_dimension_numbers<[1], [0], [0], [1], [0, 0, 1, 1], [], []>} : vector<1x8xf32>, vector<8x128xf32>, vector<1x128xf32> -> vector<1x128xf32>
    %38 = vector.broadcast %36 : vector<1x128xf32> to vector<32x128xf32>
    %39 = arith.mulf %14, %38 : vector<32x128xf32>
    %40 = vector.broadcast %37 : vector<1x128xf32> to vector<32x128xf32>
    %41 = arith.addf %39, %40 : vector<32x128xf32>
    %cst_21 = arith.constant 0.000000e+00 : f32
    %42 = vector.broadcast %cst_21 : f32 to vector<32x128xf32>
    %43 = arith.maximumf %41, %42 : vector<32x128xf32>
    %44 = vector.shape_cast %43 : vector<32x128xf32> to vector<2x16x128xf32>
    %45 = arith.truncf %44 : vector<2x16x128xf32> to vector<2x16x128xbf16>
    %46 = vector.extract_strided_slice %45 {offsets = [0, 15, 0], sizes = [2, 1, 128], strides = [1, 1, 1]} : vector<2x16x128xbf16> to vector<2x1x128xbf16>
    %47 = vector.extract_strided_slice %45 {offsets = [0, 0, 0], sizes = [2, 15, 128], strides = [1, 1, 1]} : vector<2x16x128xbf16> to vector<2x15x128xbf16>
    %48 = tpu.concatenate %46, %47 in 1 : vector<2x1x128xbf16>, vector<2x15x128xbf16> -> vector<2x16x128xbf16>
    %49 = vector.extract_strided_slice %45 {offsets = [0, 1, 0], sizes = [2, 15, 128], strides = [1, 1, 1]} : vector<2x16x128xbf16> to vector<2x15x128xbf16>
    %50 = vector.extract_strided_slice %45 {offsets = [0, 0, 0], sizes = [2, 1, 128], strides = [1, 1, 1]} : vector<2x16x128xbf16> to vector<2x1x128xbf16>
    %51 = tpu.concatenate %49, %50 in 1 : vector<2x15x128xbf16>, vector<2x1x128xbf16> -> vector<2x16x128xbf16>
    %52 = tpu.concatenate %48, %45, %51 in 2 : vector<2x16x128xbf16>, vector<2x16x128xbf16>, vector<2x16x128xbf16> -> vector<2x16x384xbf16>
    %53 = vector.shape_cast %52 : vector<2x16x384xbf16> to vector<32x384xbf16>
    %c0_22 = arith.constant 0 : index
    %c0_23 = arith.constant 0 : index
    %54 = vector.load %arg2[%c0_22, %c0_23] : memref<384x128xbf16, #tpu.memory_space<vmem>>, vector<384x128xbf16>
    %cst_24 = arith.constant dense<0.000000e+00> : vector<32x128xf32>
    %55 = tpu.matmul %53, %54, %cst_24 {dimension_numbers = #tpu.dot_dimension_numbers<[1], [0], [0], [1], [0, 0, 1, 1], [], []>} : vector<32x384xbf16>, vector<384x128xbf16>, vector<32x128xf32> -> vector<32x128xf32>
    %cst_25 = arith.constant dense<0.000000e+00> : vector<128xf32>
    %56 = vector.multi_reduction <add>, %55, %cst_25 [0] : vector<32x128xf32> to vector<128xf32>
    %57 = vector.shape_cast %56 : vector<128xf32> to vector<1x128xf32>
    %cst_26 = arith.constant dense<0.000000e+00> : vector<1x8xf32>
    %58 = tpu.matmul %57, %2, %cst_26 {dimension_numbers = #tpu.dot_dimension_numbers<[1], [0], [0], [1], [0, 0, 1, 1], [], []>} : vector<1x128xf32>, vector<128x8xf32>, vector<1x8xf32> -> vector<1x8xf32>
    %59 = arith.mulf %55, %55 : vector<32x128xf32>
    %cst_27 = arith.constant dense<0.000000e+00> : vector<128xf32>
    %60 = vector.multi_reduction <add>, %59, %cst_27 [0] : vector<32x128xf32> to vector<128xf32>
    %61 = vector.shape_cast %60 : vector<128xf32> to vector<1x128xf32>
    %cst_28 = arith.constant dense<0.000000e+00> : vector<1x8xf32>
    %62 = tpu.matmul %61, %2, %cst_28 {dimension_numbers = #tpu.dot_dimension_numbers<[1], [0], [0], [1], [0, 0, 1, 1], [], []>} : vector<1x128xf32>, vector<128x8xf32>, vector<1x8xf32> -> vector<1x8xf32>
    %cst_29 = arith.constant 0.001953125 : f32
    %63 = vector.broadcast %cst_29 : f32 to vector<1x8xf32>
    %64 = arith.mulf %58, %63 : vector<1x8xf32>
    %cst_30 = arith.constant 0.001953125 : f32
    %65 = vector.broadcast %cst_30 : f32 to vector<1x8xf32>
    %66 = arith.mulf %62, %65 : vector<1x8xf32>
    %67 = arith.mulf %64, %64 : vector<1x8xf32>
    %68 = arith.subf %66, %67 : vector<1x8xf32>
    %c0_31 = arith.constant 0 : index
    %c0_32 = arith.constant 0 : index
    %69 = vector.load %arg5[%c0_31, %c0_32] : memref<1x8xf32, #tpu.memory_space<vmem>>, vector<1x8xf32>
    %cst_33 = arith.constant 9.99999974E-6 : f32
    %70 = vector.broadcast %cst_33 : f32 to vector<1x8xf32>
    %71 = arith.addf %68, %70 : vector<1x8xf32>
    %72 = math.rsqrt %71 : vector<1x8xf32>
    %73 = arith.mulf %69, %72 : vector<1x8xf32>
    %c0_34 = arith.constant 0 : index
    %c0_35 = arith.constant 0 : index
    %74 = vector.load %arg6[%c0_34, %c0_35] : memref<1x8xf32, #tpu.memory_space<vmem>>, vector<1x8xf32>
    %75 = arith.mulf %64, %73 : vector<1x8xf32>
    %76 = arith.subf %74, %75 : vector<1x8xf32>
    %cst_36 = arith.constant dense<0.000000e+00> : vector<1x128xf32>
    %77 = tpu.matmul %73, %3, %cst_36 {dimension_numbers = #tpu.dot_dimension_numbers<[1], [0], [0], [1], [0, 0, 1, 1], [], []>} : vector<1x8xf32>, vector<8x128xf32>, vector<1x128xf32> -> vector<1x128xf32>
    %cst_37 = arith.constant dense<0.000000e+00> : vector<1x128xf32>
    %78 = tpu.matmul %76, %3, %cst_37 {dimension_numbers = #tpu.dot_dimension_numbers<[1], [0], [0], [1], [0, 0, 1, 1], [], []>} : vector<1x8xf32>, vector<8x128xf32>, vector<1x128xf32> -> vector<1x128xf32>
    %79 = vector.broadcast %77 : vector<1x128xf32> to vector<32x128xf32>
    %80 = arith.mulf %55, %79 : vector<32x128xf32>
    %81 = vector.broadcast %78 : vector<1x128xf32> to vector<32x128xf32>
    %82 = arith.addf %80, %81 : vector<32x128xf32>
    %83 = arith.addf %1, %82 : vector<32x128xf32>
    %cst_38 = arith.constant 0.000000e+00 : f32
    %84 = vector.broadcast %cst_38 : f32 to vector<32x128xf32>
    %85 = arith.maximumf %83, %84 : vector<32x128xf32>
    %86 = vector.shape_cast %85 : vector<32x128xf32> to vector<2x16x128xf32>
    %c0_39 = arith.constant 0 : index
    %c0_40 = arith.constant 0 : index
    %c0_41 = arith.constant 0 : index
    %87 = vector.load %arg9[%c0_39, %c0_40, %c0_41] : memref<2x16x128xf32, #tpu.memory_space<vmem>>, vector<2x16x128xf32>
    tpu.vector_store %arg9[%c0_39, %c0_40, %c0_41], %86 {strides = array<i32>} : memref<2x16x128xf32, #tpu.memory_space<vmem>>, vector<2x16x128xf32>,
    return
  }
}

</mosaic_0001>

<llo_original>
// kernel: tpu_custom_call.1
$region0: #{tpu_custom_call.1}
  #allocation0 [shape = 'u32[]', space=smem, size = 0x4, offset = 0x4, fixed_abs, tag = 'smem constant byte address 0x4 - core index']
  #allocation1 [shape = 'u32[72,128]{1,0:T(1,128)}', space=vmem, size = 0x9000, scoped, tag = 'internal scratch']
  %s0 = inlined_call_operand.vmem [shape: f32[2,16,128], index: 0, kind: input, shape index: {}]
  %s1 = inlined_call_operand.hbm [shape: bf16[384,128], index: 1, kind: input, shape index: {}]
  %s2 = inlined_call_operand.hbm [shape: bf16[384,128], index: 2, kind: input, shape index: {}]
  %s3 = inlined_call_operand.vmem [shape: f32[1,8], index: 3, kind: input, shape index: {}]
  %s4 = inlined_call_operand.vmem [shape: f32[1,8], index: 4, kind: input, shape index: {}]
  %s5 = inlined_call_operand.vmem [shape: f32[1,8], index: 5, kind: input, shape index: {}]
  %s6 = inlined_call_operand.vmem [shape: f32[1,8], index: 6, kind: input, shape index: {}]
  %s7 = inlined_call_operand.vmem [shape: f32[128,8], index: 7, kind: input, shape index: {}]
  %s8 = inlined_call_operand.vmem [shape: f32[8,128], index: 8, kind: input, shape index: {}]
  %s9 = inlined_call_operand.hbm [shape: f32[2,16,128], index: 9, kind: output, shape index: {}]
  %s10 = sld [smem:[#allocation0]]
  $region54: #{tpu_custom_call.1} parent=0
    _
  %s12 = ssub.s32 1, %s10
  %s13 = scalar_select 0, %s12, %s10
  $region1: #{tpu_custom_call.1} parent=0
    #allocation2 [shape = 'u8[98304]{0}', space=vmem, size = 0x18000, scoped, tag = 'input window, operand 1, single buffered']
    #allocation3 [shape = 's32[1]{0}', space=sflag, size = 0x4, scoped, tag = 'scoped memory for tpu_custom_call.1']
    #allocation4 [shape = 's32[1]{0}', space=sflag, size = 0x4, scoped, tag = 'scoped memory for tpu_custom_call.1']
    #allocation5 [shape = 'u8[98304]{0}', space=vmem, size = 0x18000, scoped, tag = 'input window, operand 2, single buffered']
    #allocation6 [shape = 's32[1]{0}', space=sflag, size = 0x4, scoped, tag = 'scoped memory for tpu_custom_call.1']
    #allocation7 [shape = 'u8[16384]{0}', space=vmem, size = 0x4000, scoped, tag = 'output window, operand 0, single buffered']
    %14 = vsyncpa [#allocation3], 0
    %15 = vsyncpa [#allocation6], 0
    %16 = vsyncpa [#allocation4], 0
    // Predicated region
    $region2: #{tpu_custom_call.1} parent=1 // pred_check
      _
    $region3: #{tpu_custom_call.1} parent=1 // pred_check_branch
      %18 = sbr.rel (0) target = $region5
    $region4: #{tpu_custom_call.1} parent=1 // pred_region
      _
    $region5: #{tpu_custom_call.1} parent=1 // pred_fallthru
      _
    // Predicated region
    $region6: #{tpu_custom_call.1} parent=1 // pred_check
      _
    $region7: #{tpu_custom_call.1} parent=1 // pred_check_branch
      %20 = sbr.rel (0) target = $region9
    $region8: #{tpu_custom_call.1} parent=1 // pred_region
      %22 = vsyncadd [#allocation3], 0
      %s23 = sshll.u32 %s1, 4
      %s24 = int_to_ptr.hbm [resolvable:$true] %s23
      %s25 = sshll.u32 [#allocation2], 4
      %s26 = int_to_ptr.vmem [resolvable:$true] %s25
      %31 = dma.hbm_to_vmem [thread:$0]  %s24, 3072, %s26, [#allocation3], 64, 64, 4
    $region9: #{tpu_custom_call.1} parent=1 // pred_fallthru
      _
    // Predicated region
    $region10: #{tpu_custom_call.1} parent=1 // pred_check
      _
    $region11: #{tpu_custom_call.1} parent=1 // pred_check_branch
      %33 = sbr.rel (0) target = $region13
    $region12: #{tpu_custom_call.1} parent=1 // pred_region
      %35 = vsyncadd [#allocation6], 0
      %s36 = sshll.u32 %s2, 4
      %s37 = int_to_ptr.hbm [resolvable:$true] %s36
      %s38 = sshll.u32 [#allocation5], 4
      %s39 = int_to_ptr.vmem [resolvable:$true] %s38
      %44 = dma.hbm_to_vmem [thread:$0]  %s37, 3072, %s39, [#allocation6], 64, 64, 4
    $region13: #{tpu_custom_call.1} parent=1 // pred_fallthru
      _
    // Predicated region
    $region14: #{tpu_custom_call.1} parent=1 // pred_check
      _
    $region15: #{tpu_custom_call.1} parent=1 // pred_check_branch
      %46 = sbr.rel (0) target = $region17
    $region16: #{tpu_custom_call.1} parent=1 // pred_region
      _
    $region17: #{tpu_custom_call.1} parent=1 // pred_fallthru
      _
    // Predicated region
    $region18: #{tpu_custom_call.1} parent=1 // pred_check
      _
    $region19: #{tpu_custom_call.1} parent=1 // pred_check_branch
      %48 = sbr.rel (0) target = $region21
    $region20: #{tpu_custom_call.1} parent=1 // pred_region
      _
    $region21: #{tpu_custom_call.1} parent=1 // pred_fallthru
      _
    // Predicated region
    $region22: #{tpu_custom_call.1} parent=1 // pred_check
      _
    $region23: #{tpu_custom_call.1} parent=1 // pred_check_branch
      %50 = sbr.rel (0) target = $region25
    $region24: #{tpu_custom_call.1} parent=1 // pred_region
      _
    $region25: #{tpu_custom_call.1} parent=1 // pred_fallthru
      _
    // Predicated region
    $region26: #{tpu_custom_call.1} parent=1 // pred_check
      _
    $region27: #{tpu_custom_call.1} parent=1 // pred_check_branch
      %52 = sbr.rel (0) target = $region29
    $region28: #{tpu_custom_call.1} parent=1 // pred_region
      _
    $region29: #{tpu_custom_call.1} parent=1 // pred_fallthru
      _
    // Predicated region
    $region30: #{tpu_custom_call.1} parent=1 // pred_check
      _
    $region31: #{tpu_custom_call.1} parent=1 // pred_check_branch
      %54 = sbr.rel (0) target = $region33
    $region32: #{tpu_custom_call.1} parent=1 // pred_region
      _
    $region33: #{tpu_custom_call.1} parent=1 // pred_fallthru
      _
    // Predicated region
    $region34: #{tpu_custom_call.1} parent=1 // pred_check
      _
    $region35: #{tpu_custom_call.1} parent=1 // pred_check_branch
      %56 = sbr.rel (0) target = $region37
    $region36: #{tpu_custom_call.1} parent=1 // pred_region
      _
    $region37: #{tpu_custom_call.1} parent=1 // pred_fallthru
      _
    // Predicated region
    $region38: #{tpu_custom_call.1} parent=1 // pred_check
      _
    $region39: #{tpu_custom_call.1} parent=1 // pred_check_branch
      %58 = sbr.rel (0) target = $region41
    $region40: #{tpu_custom_call.1} parent=1 // pred_region
      %60 = dma.done [#allocation3], 3072
    $region41: #{tpu_custom_call.1} parent=1 // pred_fallthru
      _
    // Predicated region
    $region42: #{tpu_custom_call.1} parent=1 // pred_check
      _
    $region43: #{tpu_custom_call.1} parent=1 // pred_check_branch
      %62 = sbr.rel (0) target = $region45
    $region44: #{tpu_custom_call.1} parent=1 // pred_region
      %64 = dma.done [#allocation6], 3072
    $region45: #{tpu_custom_call.1} parent=1 // pred_fallthru
      _
    %v65 = vld [vmem:[%s0] sm:$0xff]
    %v66 = vld [vmem:[%s0 + $0x8] sm:$0xff]
    %v67 = vld [vmem:[%s0 + $0x10] sm:$0xff]
    %v68 = vld [vmem:[%s0 + $0x18] sm:$0xff]
    %v69 = vld [vmem:[%s7] sm:$0xff]
    %v70 = vld [vmem:[%s7 + $0x8] sm:$0xff]
    %v71 = vld [vmem:[%s7 + $0x10] sm:$0xff]
    %v72 = vld [vmem:[%s7 + $0x18] sm:$0xff]
    %v73 = vld [vmem:[%s7 + $0x20] sm:$0xff]
    %v74 = vld [vmem:[%s7 + $0x28] sm:$0xff]
    %v75 = vld [vmem:[%s7 + $0x30] sm:$0xff]
    %v76 = vld [vmem:[%s7 + $0x38] sm:$0xff]
    %v77 = vld [vmem:[%s7 + $0x40] sm:$0xff]
    %v78 = vld [vmem:[%s7 + $0x48] sm:$0xff]
    %v79 = vld [vmem:[%s7 + $0x50] sm:$0xff]
    %v80 = vld [vmem:[%s7 + $0x58] sm:$0xff]
    %v81 = vld [vmem:[%s7 + $0x60] sm:$0xff]
    %v82 = vld [vmem:[%s7 + $0x68] sm:$0xff]
    %v83 = vld [vmem:[%s7 + $0x70] sm:$0xff]
    %v84 = vld [vmem:[%s7 + $0x78] sm:$0xff]
    %v85 = vld [vmem:[%s8] sm:$0xff]
    %v86 = vpack.c.bf16 %v65, %v65
    %v87 = vpack.c.bf16 %v66, %v66
    %v88 = vpack.c.bf16 %v67, %v67
    %v89 = vpack.c.bf16 %v68, %v68
    %v92 = vunpack.c.l.b16 %v87
    %v93 = vunpack.c.l.b16 %v89
    %v94 = vpack.c.b16 %v92, %v92
    %v95 = vpack.c.b16 %v93, %v93
    %v97 = vshrl.u32 %v94, 16
    %v99 = vrot.slane %v97, 3
    %v101 = vshrl.u32 %v95, 16
    %v103 = vrot.slane %v101, 3
    %v108 = vunpack.c.l.b16 %v86
    %v109 = vunpack.c.l.b16 %v88
    %v110 = vpack.c.b16 %v92, %v108
    %v111 = vpack.c.b16 %v93, %v109
    %v113 = vshrl.u32 %v110, 16
    %v115 = vrot.slane %v113, 7
    %v116 = vshll.u32 %v110, 16
    %v118 = vor.u32 %v115, %v116
    %v120 = vshrl.u32 %v111, 16
    %v122 = vrot.slane %v120, 7
    %v123 = vshll.u32 %v111, 16
    %v125 = vor.u32 %v122, %v123
    %vm128 = vcmask 1040384
    %vm129 = vsmask.f32 256
    %vm130 = vmand %vm128, %vm129
    %v131 = vsel %vm130, %v99, %v118
    %v132 = vsel %vm130, %v103, %v125
    %v133 = vrot.slane %v116, 1
    %v134 = vor.u32 %v113, %v133
    %v135 = vrot.slane %v123, 1
    %v136 = vor.u32 %v120, %v135
    %v139 = vpack.c.b16 %v108, %v108
    %v140 = vpack.c.b16 %v109, %v109
    %v142 = vshll.u32 %v139, 16
    %v144 = vrot.slane %v142, 1
    %v146 = vshll.u32 %v140, 16
    %v148 = vrot.slane %v146, 1
    %vm151 = vcmask 1047552
    %vm152 = vsmask.f32 7424
    %vm153 = vmand %vm151, %vm152
    %v154 = vsel %vm153, %v134, %v144
    %v155 = vsel %vm153, %v136, %v148
    %v158 = vld [vmem:[#allocation2] sm:$0xf]
    %v159 = vld [vmem:[#allocation2 + $0x4] sm:$0xf]
    %v160 = vld [vmem:[#allocation2 + $0x8] sm:$0xf]
    %v161 = vld [vmem:[#allocation2 + $0xc] sm:$0xf]
    %v162 = vld [vmem:[#allocation2 + $0x10] sm:$0xf]
    %v163 = vld [vmem:[#allocation2 + $0x14] sm:$0xf]
    %v164 = vld [vmem:[#allocation2 + $0x18] sm:$0xf]
    %v165 = vld [vmem:[#allocation2 + $0x1c] sm:$0xf]
    %v166 = vld [vmem:[#allocation2 + $0x20] sm:$0xf]
    %v167 = vld [vmem:[#allocation2 + $0x24] sm:$0xf]
    %v168 = vld [vmem:[#allocation2 + $0x28] sm:$0xf]
    %v169 = vld [vmem:[#allocation2 + $0x2c] sm:$0xf]
    %v170 = vld [vmem:[#allocation2 + $0x30] sm:$0xf]
    %v171 = vld [vmem:[#allocation2 + $0x34] sm:$0xf]
    %v172 = vld [vmem:[#allocation2 + $0x38] sm:$0xf]
    %v173 = vld [vmem:[#allocation2 + $0x3c] sm:$0xf]
    %v174 = vld [vmem:[#allocation2 + $0x40] sm:$0xf]
    %v175 = vld [vmem:[#allocation2 + $0x44] sm:$0xf]
    %v176 = vld [vmem:[#allocation2 + $0x48] sm:$0xf]
    %v177 = vld [vmem:[#allocation2 + $0x4c] sm:$0xf]
    %v178 = vld [vmem:[#allocation2 + $0x50] sm:$0xf]
    %v179 = vld [vmem:[#allocation2 + $0x54] sm:$0xf]
    %v180 = vld [vmem:[#allocation2 + $0x58] sm:$0xf]
    %v181 = vld [vmem:[#allocation2 + $0x5c] sm:$0xf]
    %v182 = vld [vmem:[#allocation2 + $0x60] sm:$0xf]
    %v183 = vld [vmem:[#allocation2 + $0x64] sm:$0xf]
    %v184 = vld [vmem:[#allocation2 + $0x68] sm:$0xf]
    %v185 = vld [vmem:[#allocation2 + $0x6c] sm:$0xf]
    %v186 = vld [vmem:[#allocation2 + $0x70] sm:$0xf]
    %v187 = vld [vmem:[#allocation2 + $0x74] sm:$0xf]
    %v188 = vld [vmem:[#allocation2 + $0x78] sm:$0xf]
    %v189 = vld [vmem:[#allocation2 + $0x7c] sm:$0xf]
    %v190 = vld [vmem:[#allocation2 + $0x80] sm:$0xf]
    %v191 = vld [vmem:[#allocation2 + $0x84] sm:$0xf]
    %v192 = vld [vmem:[#allocation2 + $0x88] sm:$0xf]
    %v193 = vld [vmem:[#allocation2 + $0x8c] sm:$0xf]
    %v194 = vld [vmem:[#allocation2 + $0x90] sm:$0xf]
    %v195 = vld [vmem:[#allocation2 + $0x94] sm:$0xf]
    %v196 = vld [vmem:[#allocation2 + $0x98] sm:$0xf]
    %v197 = vld [vmem:[#allocation2 + $0x9c] sm:$0xf]
    %v198 = vld [vmem:[#allocation2 + $0xa0] sm:$0xf]
    %v199 = vld [vmem:[#allocation2 + $0xa4] sm:$0xf]
    %v200 = vld [vmem:[#allocation2 + $0xa8] sm:$0xf]
    %v201 = vld [vmem:[#allocation2 + $0xac] sm:$0xf]
    %v202 = vld [vmem:[#allocation2 + $0xb0] sm:$0xf]
    %v203 = vld [vmem:[#allocation2 + $0xb4] sm:$0xf]
    %v204 = vld [vmem:[#allocation2 + $0xb8] sm:$0xf]
    %v205 = vld [vmem:[#allocation2 + $0xbc] sm:$0xf]
    %v254 = vunpack.c.l.b16 %v158
    %v255 = vunpack.c.l.b16 %v159
    %v256 = vunpack.c.l.b16 %v160
    %v257 = vunpack.c.l.b16 %v161
    %v258 = vunpack.c.l.b16 %v162
    %v259 = vunpack.c.l.b16 %v163
    %v260 = vunpack.c.l.b16 %v164
    %v261 = vunpack.c.l.b16 %v165
    %v262 = vunpack.c.l.b16 %v166
    %v263 = vunpack.c.l.b16 %v167
    %v264 = vunpack.c.l.b16 %v168
    %v265 = vunpack.c.l.b16 %v169
    %v266 = vunpack.c.l.b16 %v170
    %v267 = vunpack.c.l.b16 %v171
    %v268 = vunpack.c.l.b16 %v172
    %v269 = vunpack.c.l.b16 %v173
    %v270 = vunpack.c.l.b16 %v174
    %v271 = vunpack.c.l.b16 %v175
    %v272 = vunpack.c.l.b16 %v176
    %v273 = vunpack.c.l.b16 %v177
    %v274 = vunpack.c.l.b16 %v178
    %v275 = vunpack.c.l.b16 %v179
    %v276 = vunpack.c.l.b16 %v180
    %v277 = vunpack.c.l.b16 %v181
    %v278 = vunpack.c.l.b16 %v182
    %v279 = vunpack.c.l.b16 %v183
    %v280 = vunpack.c.l.b16 %v184
    %v281 = vunpack.c.l.b16 %v185
    %v282 = vunpack.c.l.b16 %v186
    %v283 = vunpack.c.l.b16 %v187
    %v284 = vunpack.c.l.b16 %v188
    %v285 = vunpack.c.l.b16 %v189
    %v286 = vunpack.c.l.b16 %v190
    %v287 = vunpack.c.l.b16 %v191
    %v288 = vunpack.c.l.b16 %v192
    %v289 = vunpack.c.l.b16 %v193
    %v290 = vunpack.c.l.b16 %v194
    %v291 = vunpack.c.l.b16 %v195
    %v292 = vunpack.c.l.b16 %v196
    %v293 = vunpack.c.l.b16 %v197
    %v294 = vunpack.c.l.b16 %v198
    %v295 = vunpack.c.l.b16 %v199
    %v296 = vunpack.c.l.b16 %v200
    %v297 = vunpack.c.l.b16 %v201
    %v298 = vunpack.c.l.b16 %v202
    %v299 = vunpack.c.l.b16 %v203
    %v300 = vunpack.c.l.b16 %v204
    %v301 = vunpack.c.l.b16 %v205
    %v302 = vpack.c.b16 %v255, %v254
    %v303 = vpack.c.b16 %v257, %v256
    %v304 = vpack.c.b16 %v259, %v258
    %v305 = vpack.c.b16 %v261, %v260
    %v306 = vpack.c.b16 %v263, %v262
    %v307 = vpack.c.b16 %v265, %v264
    %v308 = vpack.c.b16 %v267, %v266
    %v309 = vpack.c.b16 %v269, %v268
    %v310 = vpack.c.b16 %v271, %v270
    %v311 = vpack.c.b16 %v273, %v272
    %v312 = vpack.c.b16 %v275, %v274
    %v313 = vpack.c.b16 %v277, %v276
    %v314 = vpack.c.b16 %v279, %v278
    %v315 = vpack.c.b16 %v281, %v280
    %v316 = vpack.c.b16 %v283, %v282
    %v317 = vpack.c.b16 %v285, %v284
    %v318 = vpack.c.b16 %v287, %v286
    %v319 = vpack.c.b16 %v289, %v288
    %v320 = vpack.c.b16 %v291, %v290
    %v321 = vpack.c.b16 %v293, %v292
    %v322 = vpack.c.b16 %v295, %v294
    %v323 = vpack.c.b16 %v297, %v296
    %v324 = vpack.c.b16 %v299, %v298
    %v325 = vpack.c.b16 %v301, %v300
    %350 = vmatpush.bf16.msra.mxu0 %v309
    %351 = vmatpush.bf16.msra.mxu0 %v308
    %352 = vmatpush.bf16.msra.mxu0 %v307
    %353 = vmatpush.bf16.msra.mxu0 %v306
    %354 = vmatpush.bf16.msra.mxu0 %v305
    %355 = vmatpush.bf16.msra.mxu0 %v304
    %356 = vmatpush.bf16.msra.mxu0 %v303
    %357 = vmatpush.bf16.msra.mxu0 %v302
    %358 = vmatmul.bf16.gmra.mxu0 %v131
    %v359 = vpop.f32.mrf.mxu0
    %v360 = vadd.f32 0.0, %v359
    %v361 = vpop.f32.mrf.mxu0
    %v362 = vadd.f32 0.0, %v361
    %363 = vmatmul.bf16.gmra.mxu0 %v132
    %v364 = vpop.f32.mrf.mxu0
    %v365 = vadd.f32 0.0, %v364
    %v366 = vpop.f32.mrf.mxu0
    %v367 = vadd.f32 0.0, %v366
    %368 = vdwg.mxu0
    %369 = vmatpush.bf16.msra.mxu0 %v317
    %370 = vmatpush.bf16.msra.mxu0 %v316
    %371 = vmatpush.bf16.msra.mxu0 %v315
    %372 = vmatpush.bf16.msra.mxu0 %v314
    %373 = vmatpush.bf16.msra.mxu0 %v313
    %374 = vmatpush.bf16.msra.mxu0 %v312
    %375 = vmatpush.bf16.msra.mxu0 %v311
    %376 = vmatpush.bf16.msra.mxu0 %v310
    %377 = vmatmul.bf16.gmra.mxu0 %v110
    %v378 = vpop.f32.mrf.mxu0
    %v379 = vadd.f32 %v360, %v378
    %v380 = vpop.f32.mrf.mxu0
    %v381 = vadd.f32 %v362, %v380
    %382 = vmatmul.bf16.gmra.mxu0 %v111
    %v383 = vpop.f32.mrf.mxu0
    %v384 = vadd.f32 %v365, %v383
    %v385 = vpop.f32.mrf.mxu0
    %v386 = vadd.f32 %v367, %v385
    %387 = vdwg.mxu0
    %388 = vmatpush.bf16.msra.mxu0 %v325
    %389 = vmatpush.bf16.msra.mxu0 %v324
    %390 = vmatpush.bf16.msra.mxu0 %v323
    %391 = vmatpush.bf16.msra.mxu0 %v322
    %392 = vmatpush.bf16.msra.mxu0 %v321
    %393 = vmatpush.bf16.msra.mxu0 %v320
    %394 = vmatpush.bf16.msra.mxu0 %v319
    %395 = vmatpush.bf16.msra.mxu0 %v318
    %396 = vmatmul.bf16.gmra.mxu0 %v154
    %v397 = vpop.f32.mrf.mxu0
    %v398 = vadd.f32 %v379, %v397
    %v399 = vpop.f32.mrf.mxu0
    %v400 = vadd.f32 %v381, %v399
    %401 = vmatmul.bf16.gmra.mxu0 %v155
    %v402 = vpop.f32.mrf.mxu0
    %v403 = vadd.f32 %v384, %v402
    %v404 = vpop.f32.mrf.mxu0
    %v405 = vadd.f32 %v386, %v404
    %406 = vdwg.mxu0
    %v407 = vadd.f32 %v398, %v400
    %v408 = vadd.f32 %v407, %v403
    %v409 = vadd.f32 %v408, %v405
    %v410 = vrot.slane %v409, 4
    %v411 = vadd.f32 %v409, %v410
    %v412 = vrot.slane %v411, 2
    %v413 = vadd.f32 %v411, %v412
    %v414 = vrot.slane %v413, 1
    %v415 = vadd.f32 %v413, %v414
    %416 = vmatpush.msra.mxu0 %v84
    %417 = vmatpush.msra.mxu0 %v83
    %418 = vmatpush.msra.mxu0 %v82
    %419 = vmatpush.msra.mxu0 %v81
    %420 = vmatpush.msra.mxu0 %v80
    %421 = vmatpush.msra.mxu0 %v79
    %422 = vmatpush.msra.mxu0 %v78
    %423 = vmatpush.msra.mxu0 %v77
    %424 = vmatpush.msra.mxu0 %v76
    %425 = vmatpush.msra.mxu0 %v75
    %426 = vmatpush.msra.mxu0 %v74
    %427 = vmatpush.msra.mxu0 %v73
    %428 = vmatpush.msra.mxu0 %v72
    %429 = vmatpush.msra.mxu0 %v71
    %430 = vmatpush.msra.mxu0 %v70
    %431 = vmatpush.msra.mxu0 %v69
    %432 = vmatmul.f32.gmra.mxu0 %v415
    %v433 = vpop.f32.mrf.mxu0
    %v434 = vadd.f32 0.0, %v433
    %435 = vdwg.mxu0
    %v436 = vmul.f32 %v398, %v398
    %v437 = vmul.f32 %v400, %v400
    %v438 = vmul.f32 %v403, %v403
    %v439 = vmul.f32 %v405, %v405
    %v440 = vadd.f32 %v436, %v437
    %v441 = vadd.f32 %v440, %v438
    %v442 = vadd.f32 %v441, %v439
    %v443 = vrot.slane %v442, 4
    %v444 = vadd.f32 %v442, %v443
    %v445 = vrot.slane %v444, 2
    %v446 = vadd.f32 %v444, %v445
    %v447 = vrot.slane %v446, 1
    %v448 = vadd.f32 %v446, %v447
    %449 = vmatpush.msra.mxu0 %v84
    %450 = vmatpush.msra.mxu0 %v83
    %451 = vmatpush.msra.mxu0 %v82
    %452 = vmatpush.msra.mxu0 %v81
    %453 = vmatpush.msra.mxu0 %v80
    %454 = vmatpush.msra.mxu0 %v79
    %455 = vmatpush.msra.mxu0 %v78
    %456 = vmatpush.msra.mxu0 %v77
    %457 = vmatpush.msra.mxu0 %v76
    %458 = vmatpush.msra.mxu0 %v75
    %459 = vmatpush.msra.mxu0 %v74
    %460 = vmatpush.msra.mxu0 %v73
    %461 = vmatpush.msra.mxu0 %v72
    %462 = vmatpush.msra.mxu0 %v71
    %463 = vmatpush.msra.mxu0 %v70
    %464 = vmatpush.msra.mxu0 %v69
    %465 = vmatmul.f32.gmra.mxu0 %v448
    %v466 = vpop.f32.mrf.mxu0
    %v467 = vadd.f32 0.0, %v466
    %468 = vdwg.mxu0
    %v469 = vmul.f32 %v434, 0.001953125
    %v470 = vmul.f32 %v467, 0.001953125
    %v471 = vmul.f32 %v469, %v469
    %v472 = vsub.f32 %v470, %v471
    %v473 = vld [vmem:[%s3] sm:$0x1]
    %v474 = vadd.f32 %v472, 1e-05
    %v475 = vrsqrt.pop %v474
    %v476 = vmul.f32 %v475, %v474
    %v477 = vmul.f32 %v476, %v475
    %v478 = vmul.f32 0.5, %v477
    %v479 = vsub.f32 1.5, %v478
    %v480 = vmul.f32 %v475, %v479
    %vm481 = vweird.f32 %v474
    %vm482 = vweird.f32 %v475
    %vm483 = vmor %vm481, %vm482
    %v484 = vsel %vm483, %v475, %v480
    %v485 = vmul.f32 %v473, %v484
    %v486 = vld [vmem:[%s4] sm:$0x1]
    %v487 = vmul.f32 %v469, %v485
    %v488 = vsub.f32 %v486, %v487
    %vm489 = vcmask 64512
    %v491 = vsel %vm489, %v485, 0
    %493 = vmatpush.msra.mxu0 0.0
    %494 = vmatpush.msra.mxu0 0.0
    %495 = vmatpush.msra.mxu0 0.0
    %496 = vmatpush.msra.mxu0 0.0
    %497 = vmatpush.msra.mxu0 0.0
    %498 = vmatpush.msra.mxu0 0.0
    %499 = vmatpush.msra.mxu0 0.0
    %500 = vmatpush.msra.mxu0 0.0
    %501 = vmatpush.msra.mxu0 0.0
    %502 = vmatpush.msra.mxu0 0.0
    %503 = vmatpush.msra.mxu0 0.0
    %504 = vmatpush.msra.mxu0 0.0
    %505 = vmatpush.msra.mxu0 0.0
    %506 = vmatpush.msra.mxu0 0.0
    %507 = vmatpush.msra.mxu0 0.0
    %508 = vmatpush.msra.mxu0 %v85
    %509 = vmatmul.f32.gmra.mxu0 %v491
    %v510 = vpop.f32.mrf.mxu0
    %v511 = vadd.f32 0.0, %v510
    %512 = vdwg.mxu0
    %v514 = vsel %vm489, %v488, 0
    %516 = vmatpush.msra.mxu0 0.0
    %517 = vmatpush.msra.mxu0 0.0
    %518 = vmatpush.msra.mxu0 0.0
    %519 = vmatpush.msra.mxu0 0.0
    %520 = vmatpush.msra.mxu0 0.0
    %521 = vmatpush.msra.mxu0 0.0
    %522 = vmatpush.msra.mxu0 0.0
    %523 = vmatpush.msra.mxu0 0.0
    %524 = vmatpush.msra.mxu0 0.0
    %525 = vmatpush.msra.mxu0 0.0
    %526 = vmatpush.msra.mxu0 0.0
    %527 = vmatpush.msra.mxu0 0.0
    %528 = vmatpush.msra.mxu0 0.0
    %529 = vmatpush.msra.mxu0 0.0
    %530 = vmatpush.msra.mxu0 0.0
    %531 = vmatpush.msra.mxu0 %v85
    %532 = vmatmul.f32.gmra.mxu0 %v514
    %v533 = vpop.f32.mrf.mxu0
    %v534 = vadd.f32 0.0, %v533
    %535 = vdwg.mxu0
    %v536 = vperm.slane %v511, 0
    %v537 = vmul.f32 %v398, %v536
    %v538 = vmul.f32 %v400, %v536
    %v539 = vmul.f32 %v403, %v536
    %v540 = vmul.f32 %v405, %v536
    %v541 = vperm.slane %v534, 0
    %v542 = vadd.f32 %v537, %v541
    %v543 = vadd.f32 %v538, %v541
    %v544 = vadd.f32 %v539, %v541
    %v545 = vadd.f32 %v540, %v541
    %v546 = vmax.f32 %v542, 0.0
    %v547 = vmax.f32 %v543, 0.0
    %v548 = vmax.f32 %v544, 0.0
    %v549 = vmax.f32 %v545, 0.0
    %v550 = vpack.c.bf16 %v546, %v546
    %v551 = vpack.c.bf16 %v547, %v547
    %v552 = vpack.c.bf16 %v548, %v548
    %v553 = vpack.c.bf16 %v549, %v549
    %v556 = vunpack.c.l.b16 %v551
    %v557 = vunpack.c.l.b16 %v553
    %v558 = vpack.c.b16 %v556, %v556
    %v559 = vpack.c.b16 %v557, %v557
    %v561 = vshrl.u32 %v558, 16
    %v563 = vrot.slane %v561, 3
    %v565 = vshrl.u32 %v559, 16
    %v567 = vrot.slane %v565, 3
    %v572 = vunpack.c.l.b16 %v550
    %v573 = vunpack.c.l.b16 %v552
    %v574 = vpack.c.b16 %v556, %v572
    %v575 = vpack.c.b16 %v557, %v573
    %v577 = vshrl.u32 %v574, 16
    %v579 = vrot.slane %v577, 7
    %v580 = vshll.u32 %v574, 16
    %v582 = vor.u32 %v579, %v580
    %v584 = vshrl.u32 %v575, 16
    %v586 = vrot.slane %v584, 7
    %v587 = vshll.u32 %v575, 16
    %v589 = vor.u32 %v586, %v587
    %v592 = vsel %vm130, %v563, %v582
    %v593 = vsel %vm130, %v567, %v589
    %v594 = vrot.slane %v580, 1
    %v595 = vor.u32 %v577, %v594
    %v596 = vrot.slane %v587, 1
    %v597 = vor.u32 %v584, %v596
    %v600 = vpack.c.b16 %v572, %v572
    %v601 = vpack.c.b16 %v573, %v573
    %v603 = vshll.u32 %v600, 16
    %v605 = vrot.slane %v603, 1
    %v607 = vshll.u32 %v601, 16
    %v609 = vrot.slane %v607, 1
    %v612 = vsel %vm153, %v595, %v605
    %v613 = vsel %vm153, %v597, %v609
    %v616 = vld [vmem:[#allocation5] sm:$0xf]
    %v617 = vld [vmem:[#allocation5 + $0x4] sm:$0xf]
    %v618 = vld [vmem:[#allocation5 + $0x8] sm:$0xf]
    %v619 = vld [vmem:[#allocation5 + $0xc] sm:$0xf]
    %v620 = vld [vmem:[#allocation5 + $0x10] sm:$0xf]
    %v621 = vld [vmem:[#allocation5 + $0x14] sm:$0xf]
    %v622 = vld [vmem:[#allocation5 + $0x18] sm:$0xf]
    %v623 = vld [vmem:[#allocation5 + $0x1c] sm:$0xf]
    %v624 = vld [vmem:[#allocation5 + $0x20] sm:$0xf]
    %v625 = vld [vmem:[#allocation5 + $0x24] sm:$0xf]
    %v626 = vld [vmem:[#allocation5 + $0x28] sm:$0xf]
    %v627 = vld [vmem:[#allocation5 + $0x2c] sm:$0xf]
    %v628 = vld [vmem:[#allocation5 + $0x30] sm:$0xf]
    %v629 = vld [vmem:[#allocation5 + $0x34] sm:$0xf]
    %v630 = vld [vmem:[#allocation5 + $0x38] sm:$0xf]
    %v631 = vld [vmem:[#allocation5 + $0x3c] sm:$0xf]
    %v632 = vld [vmem:[#allocation5 + $0x40] sm:$0xf]
    %v633 = vld [vmem:[#allocation5 + $0x44] sm:$0xf]
    %v634 = vld [vmem:[#allocation5 + $0x48] sm:$0xf]
    %v635 = vld [vmem:[#allocation5 + $0x4c] sm:$0xf]
    %v636 = vld [vmem:[#allocation5 + $0x50] sm:$0xf]
    %v637 = vld [vmem:[#allocation5 + $0x54] sm:$0xf]
    %v638 = vld [vmem:[#allocation5 + $0x58] sm:$0xf]
    %v639 = vld [vmem:[#allocation5 + $0x5c] sm:$0xf]
    %v640 = vld [vmem:[#allocation5 + $0x60] sm:$0xf]
    %v641 = vld [vmem:[#allocation5 + $0x64] sm:$0xf]
    %v642 = vld [vmem:[#allocation5 + $0x68] sm:$0xf]
    %v643 = vld [vmem:[#allocation5 + $0x6c] sm:$0xf]
    %v644 = vld [vmem:[#allocation5 + $0x70] sm:$0xf]
    %v645 = vld [vmem:[#allocation5 + $0x74] sm:$0xf]
    %v646 = vld [vmem:[#allocation5 + $0x78] sm:$0xf]
    %v647 = vld [vmem:[#allocation5 + $0x7c] sm:$0xf]
    %v648 = vld [vmem:[#allocation5 + $0x80] sm:$0xf]
    %v649 = vld [vmem:[#allocation5 + $0x84] sm:$0xf]
    %v650 = vld [vmem:[#allocation5 + $0x88] sm:$0xf]
    %v651 = vld [vmem:[#allocation5 + $0x8c] sm:$0xf]
    %v652 = vld [vmem:[#allocation5 + $0x90] sm:$0xf]
    %v653 = vld [vmem:[#allocation5 + $0x94] sm:$0xf]
    %v654 = vld [vmem:[#allocation5 + $0x98] sm:$0xf]
    %v655 = vld [vmem:[#allocation5 + $0x9c] sm:$0xf]
    %v656 = vld [vmem:[#allocation5 + $0xa0] sm:$0xf]
    %v657 = vld [vmem:[#allocation5 + $0xa4] sm:$0xf]
    %v658 = vld [vmem:[#allocation5 + $0xa8] sm:$0xf]
    %v659 = vld [vmem:[#allocation5 + $0xac] sm:$0xf]
    %v660 = vld [vmem:[#allocation5 + $0xb0] sm:$0xf]
    %v661 = vld [vmem:[#allocation5 + $0xb4] sm:$0xf]
    %v662 = vld [vmem:[#allocation5 + $0xb8] sm:$0xf]
    %v663 = vld [vmem:[#allocation5 + $0xbc] sm:$0xf]
    %v712 = vunpack.c.l.b16 %v616
    %v713 = vunpack.c.l.b16 %v617
    %v714 = vunpack.c.l.b16 %v618
    %v715 = vunpack.c.l.b16 %v619
    %v716 = vunpack.c.l.b16 %v620
    %v717 = vunpack.c.l.b16 %v621
    %v718 = vunpack.c.l.b16 %v622
    %v719 = vunpack.c.l.b16 %v623
    %v720 = vunpack.c.l.b16 %v624
    %v721 = vunpack.c.l.b16 %v625
    %v722 = vunpack.c.l.b16 %v626
    %v723 = vunpack.c.l.b16 %v627
    %v724 = vunpack.c.l.b16 %v628
    %v725 = vunpack.c.l.b16 %v629
    %v726 = vunpack.c.l.b16 %v630
    %v727 = vunpack.c.l.b16 %v631
    %v728 = vunpack.c.l.b16 %v632
    %v729 = vunpack.c.l.b16 %v633
    %v730 = vunpack.c.l.b16 %v634
    %v731 = vunpack.c.l.b16 %v635
    %v732 = vunpack.c.l.b16 %v636
    %v733 = vunpack.c.l.b16 %v637
    %v734 = vunpack.c.l.b16 %v638
    %v735 = vunpack.c.l.b16 %v639
    %v736 = vunpack.c.l.b16 %v640
    %v737 = vunpack.c.l.b16 %v641
    %v738 = vunpack.c.l.b16 %v642
    %v739 = vunpack.c.l.b16 %v643
    %v740 = vunpack.c.l.b16 %v644
    %v741 = vunpack.c.l.b16 %v645
    %v742 = vunpack.c.l.b16 %v646
    %v743 = vunpack.c.l.b16 %v647
    %v744 = vunpack.c.l.b16 %v648
    %v745 = vunpack.c.l.b16 %v649
    %v746 = vunpack.c.l.b16 %v650
    %v747 = vunpack.c.l.b16 %v651
    %v748 = vunpack.c.l.b16 %v652
    %v749 = vunpack.c.l.b16 %v653
    %v750 = vunpack.c.l.b16 %v654
    %v751 = vunpack.c.l.b16 %v655
    %v752 = vunpack.c.l.b16 %v656
    %v753 = vunpack.c.l.b16 %v657
    %v754 = vunpack.c.l.b16 %v658
    %v755 = vunpack.c.l.b16 %v659
    %v756 = vunpack.c.l.b16 %v660
    %v757 = vunpack.c.l.b16 %v661
    %v758 = vunpack.c.l.b16 %v662
    %v759 = vunpack.c.l.b16 %v663
    %v760 = vpack.c.b16 %v713, %v712
    %v761 = vpack.c.b16 %v715, %v714
    %v762 = vpack.c.b16 %v717, %v716
    %v763 = vpack.c.b16 %v719, %v718
    %v764 = vpack.c.b16 %v721, %v720
    %v765 = vpack.c.b16 %v723, %v722
    %v766 = vpack.c.b16 %v725, %v724
    %v767 = vpack.c.b16 %v727, %v726
    %v768 = vpack.c.b16 %v729, %v728
    %v769 = vpack.c.b16 %v731, %v730
    %v770 = vpack.c.b16 %v733, %v732
    %v771 = vpack.c.b16 %v735, %v734
    %v772 = vpack.c.b16 %v737, %v736
    %v773 = vpack.c.b16 %v739, %v738
    %v774 = vpack.c.b16 %v741, %v740
    %v775 = vpack.c.b16 %v743, %v742
    %v776 = vpack.c.b16 %v745, %v744
    %v777 = vpack.c.b16 %v747, %v746
    %v778 = vpack.c.b16 %v749, %v748
    %v779 = vpack.c.b16 %v751, %v750
    %v780 = vpack.c.b16 %v753, %v752
    %v781 = vpack.c.b16 %v755, %v754
    %v782 = vpack.c.b16 %v757, %v756
    %v783 = vpack.c.b16 %v759, %v758
    %808 = vmatpush.bf16.msra.mxu0 %v767
    %809 = vmatpush.bf16.msra.mxu0 %v766
    %810 = vmatpush.bf16.msra.mxu0 %v765
    %811 = vmatpush.bf16.msra.mxu0 %v764
    %812 = vmatpush.bf16.msra.mxu0 %v763
    %813 = vmatpush.bf16.msra.mxu0 %v762
    %814 = vmatpush.bf16.msra.mxu0 %v761
    %815 = vmatpush.bf16.msra.mxu0 %v760
    %816 = vmatmul.bf16.gmra.mxu0 %v592
    %v817 = vpop.f32.mrf.mxu0
    %v818 = vadd.f32 0.0, %v817
    %v819 = vpop.f32.mrf.mxu0
    %v820 = vadd.f32 0.0, %v819
    %821 = vmatmul.bf16.gmra.mxu0 %v593
    %v822 = vpop.f32.mrf.mxu0
    %v823 = vadd.f32 0.0, %v822
    %v824 = vpop.f32.mrf.mxu0
    %v825 = vadd.f32 0.0, %v824
    %826 = vdwg.mxu0
    %827 = vmatpush.bf16.msra.mxu0 %v775
    %828 = vmatpush.bf16.msra.mxu0 %v774
    %829 = vmatpush.bf16.msra.mxu0 %v773
    %830 = vmatpush.bf16.msra.mxu0 %v772
    %831 = vmatpush.bf16.msra.mxu0 %v771
    %832 = vmatpush.bf16.msra.mxu0 %v770
    %833 = vmatpush.bf16.msra.mxu0 %v769
    %834 = vmatpush.bf16.msra.mxu0 %v768
    %835 = vmatmul.bf16.gmra.mxu0 %v574
    %v836 = vpop.f32.mrf.mxu0
    %v837 = vadd.f32 %v818, %v836
    %v838 = vpop.f32.mrf.mxu0
    %v839 = vadd.f32 %v820, %v838
    %840 = vmatmul.bf16.gmra.mxu0 %v575
    %v841 = vpop.f32.mrf.mxu0
    %v842 = vadd.f32 %v823, %v841
    %v843 = vpop.f32.mrf.mxu0
    %v844 = vadd.f32 %v825, %v843
    %845 = vdwg.mxu0
    %846 = vmatpush.bf16.msra.mxu0 %v783
    %847 = vmatpush.bf16.msra.mxu0 %v782
    %848 = vmatpush.bf16.msra.mxu0 %v781
    %849 = vmatpush.bf16.msra.mxu0 %v780
    %850 = vmatpush.bf16.msra.mxu0 %v779
    %851 = vmatpush.bf16.msra.mxu0 %v778
    %852 = vmatpush.bf16.msra.mxu0 %v777
    %853 = vmatpush.bf16.msra.mxu0 %v776
    %854 = vmatmul.bf16.gmra.mxu0 %v612
    %v855 = vpop.f32.mrf.mxu0
    %v856 = vadd.f32 %v837, %v855
    %v857 = vpop.f32.mrf.mxu0
    %v858 = vadd.f32 %v839, %v857
    %859 = vmatmul.bf16.gmra.mxu0 %v613
    %v860 = vpop.f32.mrf.mxu0
    %v861 = vadd.f32 %v842, %v860
    %v862 = vpop.f32.mrf.mxu0
    %v863 = vadd.f32 %v844, %v862
    %864 = vdwg.mxu0
    %v865 = vadd.f32 %v856, %v858
    %v866 = vadd.f32 %v865, %v861
    %v867 = vadd.f32 %v866, %v863
    %v868 = vrot.slane %v867, 4
    %v869 = vadd.f32 %v867, %v868
    %v870 = vrot.slane %v869, 2
    %v871 = vadd.f32 %v869, %v870
    %v872 = vrot.slane %v871, 1
    %v873 = vadd.f32 %v871, %v872
    %874 = vmatpush.msra.mxu0 %v84
    %875 = vmatpush.msra.mxu0 %v83
    %876 = vmatpush.msra.mxu0 %v82
    %877 = vmatpush.msra.mxu0 %v81
    %878 = vmatpush.msra.mxu0 %v80
    %879 = vmatpush.msra.mxu0 %v79
    %880 = vmatpush.msra.mxu0 %v78
    %881 = vmatpush.msra.mxu0 %v77
    %882 = vmatpush.msra.mxu0 %v76
    %883 = vmatpush.msra.mxu0 %v75
    %884 = vmatpush.msra.mxu0 %v74
    %885 = vmatpush.msra.mxu0 %v73
    %886 = vmatpush.msra.mxu0 %v72
    %887 = vmatpush.msra.mxu0 %v71
    %888 = vmatpush.msra.mxu0 %v70
    %889 = vmatpush.msra.mxu0 %v69
    %890 = vmatmul.f32.gmra.mxu0 %v873
    %v891 = vpop.f32.mrf.mxu0
    %v892 = vadd.f32 0.0, %v891
    %893 = vdwg.mxu0
    %v894 = vmul.f32 %v856, %v856
    %v895 = vmul.f32 %v858, %v858
    %v896 = vmul.f32 %v861, %v861
    %v897 = vmul.f32 %v863, %v863
    %v898 = vadd.f32 %v894, %v895
    %v899 = vadd.f32 %v898, %v896
    %v900 = vadd.f32 %v899, %v897
    %v901 = vrot.slane %v900, 4
    %v902 = vadd.f32 %v900, %v901
    %v903 = vrot.slane %v902, 2
    %v904 = vadd.f32 %v902, %v903
    %v905 = vrot.slane %v904, 1
    %v906 = vadd.f32 %v904, %v905
    %907 = vmatpush.msra.mxu0 %v84
    %908 = vmatpush.msra.mxu0 %v83
    %909 = vmatpush.msra.mxu0 %v82
    %910 = vmatpush.msra.mxu0 %v81
    %911 = vmatpush.msra.mxu0 %v80
    %912 = vmatpush.msra.mxu0 %v79
    %913 = vmatpush.msra.mxu0 %v78
    %914 = vmatpush.msra.mxu0 %v77
    %915 = vmatpush.msra.mxu0 %v76
    %916 = vmatpush.msra.mxu0 %v75
    %917 = vmatpush.msra.mxu0 %v74
    %918 = vmatpush.msra.mxu0 %v73
    %919 = vmatpush.msra.mxu0 %v72
    %920 = vmatpush.msra.mxu0 %v71
    %921 = vmatpush.msra.mxu0 %v70
    %922 = vmatpush.msra.mxu0 %v69
    %923 = vmatmul.f32.gmra.mxu0 %v906
    %v924 = vpop.f32.mrf.mxu0
    %v925 = vadd.f32 0.0, %v924
    %926 = vdwg.mxu0
    %v927 = vmul.f32 %v892, 0.001953125
    %v928 = vmul.f32 %v925, 0.001953125
    %v929 = vmul.f32 %v927, %v927
    %v930 = vsub.f32 %v928, %v929
    %v931 = vld [vmem:[%s5] sm:$0x1]
    %v932 = vadd.f32 %v930, 1e-05
    %v933 = vrsqrt.pop %v932
    %v934 = vmul.f32 %v933, %v932
    %v935 = vmul.f32 %v934, %v933
    %v936 = vmul.f32 0.5, %v935
    %v937 = vsub.f32 1.5, %v936
    %v938 = vmul.f32 %v933, %v937
    %vm939 = vweird.f32 %v932
    %vm940 = vweird.f32 %v933
    %vm941 = vmor %vm939, %vm940
    %v942 = vsel %vm941, %v933, %v938
    %v943 = vmul.f32 %v931, %v942
    %v944 = vld [vmem:[%s6] sm:$0x1]
    %v945 = vmul.f32 %v927, %v943
    %v946 = vsub.f32 %v944, %v945
    %v948 = vsel %vm489, %v943, 0
    %950 = vmatpush.msra.mxu0 0.0
    %951 = vmatpush.msra.mxu0 0.0
    %952 = vmatpush.msra.mxu0 0.0
    %953 = vmatpush.msra.mxu0 0.0
    %954 = vmatpush.msra.mxu0 0.0
    %955 = vmatpush.msra.mxu0 0.0
    %956 = vmatpush.msra.mxu0 0.0
    %957 = vmatpush.msra.mxu0 0.0
    %958 = vmatpush.msra.mxu0 0.0
    %959 = vmatpush.msra.mxu0 0.0
    %960 = vmatpush.msra.mxu0 0.0
    %961 = vmatpush.msra.mxu0 0.0
    %962 = vmatpush.msra.mxu0 0.0
    %963 = vmatpush.msra.mxu0 0.0
    %964 = vmatpush.msra.mxu0 0.0
    %965 = vmatpush.msra.mxu0 %v85
    %966 = vmatmul.f32.gmra.mxu0 %v948
    %v967 = vpop.f32.mrf.mxu0
    %v968 = vadd.f32 0.0, %v967
    %969 = vdwg.mxu0
    %v971 = vsel %vm489, %v946, 0
    %973 = vmatpush.msra.mxu0 0.0
    %974 = vmatpush.msra.mxu0 0.0
    %975 = vmatpush.msra.mxu0 0.0
    %976 = vmatpush.msra.mxu0 0.0
    %977 = vmatpush.msra.mxu0 0.0
    %978 = vmatpush.msra.mxu0 0.0
    %979 = vmatpush.msra.mxu0 0.0
    %980 = vmatpush.msra.mxu0 0.0
    %981 = vmatpush.msra.mxu0 0.0
    %982 = vmatpush.msra.mxu0 0.0
    %983 = vmatpush.msra.mxu0 0.0
    %984 = vmatpush.msra.mxu0 0.0
    %985 = vmatpush.msra.mxu0 0.0
    %986 = vmatpush.msra.mxu0 0.0
    %987 = vmatpush.msra.mxu0 0.0
    %988 = vmatpush.msra.mxu0 %v85
    %989 = vmatmul.f32.gmra.mxu0 %v971
    %v990 = vpop.f32.mrf.mxu0
    %v991 = vadd.f32 0.0, %v990
    %992 = vdwg.mxu0
    %v993 = vperm.slane %v968, 0
    %v994 = vmul.f32 %v856, %v993
    %v995 = vmul.f32 %v858, %v993
    %v996 = vmul.f32 %v861, %v993
    %v997 = vmul.f32 %v863, %v993
    %v998 = vperm.slane %v991, 0
    %v999 = vadd.f32 %v994, %v998
    %v1000 = vadd.f32 %v995, %v998
    %v1001 = vadd.f32 %v996, %v998
    %v1002 = vadd.f32 %v997, %v998
    %v1003 = vadd.f32 %v65, %v999
    %v1004 = vadd.f32 %v66, %v1000
    %v1005 = vadd.f32 %v67, %v1001
    %v1006 = vadd.f32 %v68, %v1002
    %v1007 = vmax.f32 %v1003, 0.0
    %v1008 = vmax.f32 %v1004, 0.0
    %v1009 = vmax.f32 %v1005, 0.0
    %v1010 = vmax.f32 %v1006, 0.0
    %1011 = vst [vmem:[#allocation7] sm:$0xff] %v1007
    %1012 = vst [vmem:[#allocation7 + $0x8] sm:$0xff] %v1008
    %1013 = vst [vmem:[#allocation7 + $0x10] sm:$0xff] %v1009
    %1014 = vst [vmem:[#allocation7 + $0x18] sm:$0xff] %v1010
    // Predicated region
    $region46: #{tpu_custom_call.1} parent=1 // pred_check
      _
    $region47: #{tpu_custom_call.1} parent=1 // pred_check_branch
      %1016 = sbr.rel (0) target = $region49
    $region48: #{tpu_custom_call.1} parent=1 // pred_region
      %1018 = vsyncadd [#allocation4], 0
      %s1019 = sshll.u32 [#allocation7], 4
      %s1020 = int_to_ptr.vmem [resolvable:$true] %s1019
      %s1021 = sshll.u32 %s9, 4
      %s1022 = int_to_ptr.hbm [resolvable:$true] %s1021
      %1027 = dma.vmem_to_hbm [thread:$0]  %s1020, 512, %s1022, [#allocation4], 128, 128, 8
    $region49: #{tpu_custom_call.1} parent=1 // pred_fallthru
      _
    // Predicated region
    $region50: #{tpu_custom_call.1} parent=1 // pred_check
      _
    $region51: #{tpu_custom_call.1} parent=1 // pred_check_branch
      %1029 = sbr.rel (0) target = $region53
    $region52: #{tpu_custom_call.1} parent=1 // pred_region
      %1031 = dma.done [#allocation4], 512
    $region53: #{tpu_custom_call.1} parent=1 // pred_fallthru
      _
    %1032 = vsyncpa [#allocation3], 1
    %1033 = vsyncpa [#allocation6], 1
    %1034 = vsyncpa [#allocation4], 1

</llo_original>
